<compile_context>
chip_gen: v5e
topology: v5e:2x2
jax: 0.10.0
libtpu: 0.0.40
codegen_flags: <defaults>
</compile_context>

<pallas_src>
import functools

import jax
import jax.numpy as jnp
import numpy as np
from jax.experimental import pallas as pl
from jax.experimental.pallas import tpu as pltpu


def _round_up(x, m):
    return (x + m - 1) // m * m


def _pick_group(s2, cin):
    """Largest divisor g of s2 whose lane width g*cin is 128-aligned (and no wider
    than max(128, cin)), so in-kernel lane slices of the s2d input are aligned."""
    best = 1
    for g in range(1, s2 + 1):
        if s2 % g == 0 and (g * cin) % 128 == 0 and g * cin <= max(128, cin):
            best = g
    return best


# ---------------------------------------------------------------------------
# Fused kernel (per row tile of the block output):
#   prompt = Conv2d_{k=s,stride=s}( relu(patch_embed @ Wp + bp) )
#   out    = prompt + block_out
# realized as: for each group of g kernel positions,
#   z   = relu( p[:, group lanes] @ block_diag_g(Wp) + tile_g(bp) )    (MXU + VPU)
#   acc += z @ Wc[group rows, :]                                        (MXU)
# Everything stays in VMEM; only p, r and the result touch HBM.
# ---------------------------------------------------------------------------
def _fused_adapter_kernel(p_ref, wpg_ref, bpg_ref, wc_ref, bc_ref, r_ref, o_ref,
                          *, groups, gk, gh):
    # p: (tn, s2*Cin)   wpg: (gk, gh)   bpg: (1, gh)
    # wc: (s2*Hid, Cout)  bc: (1, Cout)  r/o: (tn, Cout)
    acc = r_ref[...].astype(jnp.float32) + bc_ref[...].astype(jnp.float32)
    wpg = wpg_ref[...]                       # hoisted: loaded once per tile
    bpg = bpg_ref[...].astype(jnp.float32)   # hoisted
    for j in range(groups):  # static unroll; groups <= 16 (stride=8, Cin=32)
        xg = p_ref[:, j * gk:(j + 1) * gk]   # 128-aligned (or full-width) lane slice
        z = jnp.maximum(
            jnp.dot(xg, wpg, preferred_element_type=jnp.float32) + bpg, 0.0)
        acc = acc + jnp.dot(z, wc_ref[j * gh:(j + 1) * gh, :],   # 8-aligned sublane slice
                            preferred_element_type=jnp.float32)
    o_ref[...] = acc.astype(o_ref.dtype)


@functools.partial(jax.jit, static_argnames=("stride", "group", "tile_n"))
def fused_conv_adapter_add(patch_bhwc, block_out_bhwc, wp_g, bp_g, wc, bc,
                           stride, group, *, tile_n=512):
    """out = ConvAdapter(relu(Linear(patch_bhwc))) + block_out_bhwc   (all NHWC)."""
    B, H, W, Cin = patch_bhwc.shape
    Bo, Ho, Wo, Cout = block_out_bhwc.shape
    assert Bo == B and Ho * stride == H and Wo * stride == W
    s2 = stride * stride
    Kin = s2 * Cin
    gk = group * Cin
    gh = bp_g.shape[1]
    groups = s2 // group

    # Space-to-depth on the raw patch-embed activations (layout glue only, fused by
    # XLA under the surrounding jit; the 16-channel adapter activations never hit HBM).
    p = patch_bhwc.reshape(B, Ho, stride, Wo, stride, Cin)
    p = p.transpose(0, 1, 3, 2, 4, 5).reshape(B * Ho * Wo, Kin)
    r = block_out_bhwc.reshape(B * Ho * Wo, Cout)

    N = B * Ho * Wo
    tn = max(8, min(_round_up(tile_n, 8), _round_up(N, 8)))
    n_pad = _round_up(N, tn)
    if n_pad != N:  # ragged row counts: pad, compute, slice back
        p = jnp.pad(p, ((0, n_pad - N), (0, 0)))
        r = jnp.pad(r, ((0, n_pad - N), (0, 0)))

    kernel = functools.partial(_fused_adapter_kernel, groups=groups, gk=gk, gh=gh)
    out = pl.pallas_call(
        kernel,
        out_shape=jax.ShapeDtypeStruct((n_pad, Cout), block_out_bhwc.dtype),
        grid_spec=pltpu.PrefetchScalarGridSpec(
            num_scalar_prefetch=0,
            grid=(n_pad // tn,),
            in_specs=[
                pl.BlockSpec((tn, Kin), lambda i: (i, 0)),          # p tile (pipelined)
                pl.BlockSpec((gk, gh), lambda i: (0, 0)),           # grouped Wp (resident)
                pl.BlockSpec((1, gh), lambda i: (0, 0)),
                pl.BlockSpec((wc.shape[0], Cout), lambda i: (0, 0)),
                pl.BlockSpec((1, Cout), lambda i: (0, 0)),
                pl.BlockSpec((tn, Cout), lambda i: (i, 0)),         # residual tile
            ],
            out_specs=pl.BlockSpec((tn, Cout), lambda i: (i, 0)),
        ),
        input_output_aliases={5: 0},  # result written in place of the residual buffer
        compiler_params=pltpu.CompilerParams(
            dimension_semantics=("parallel",),      # independent rows -> megacore / 2 TCs
            vmem_limit_bytes=32 * 1024 * 1024,      # explicit, safe on v5e/v6e/v7x
        ),
    )(p, wp_g, bp_g, wc, bc, r)
    if n_pad != N:
        out = out[:N]
    return out.reshape(B, Ho, Wo, Cout)


# ---------------------------------------------------------------------------
# JAX-side module mirroring the adapter bookkeeping of the PyTorch encoder.
# ---------------------------------------------------------------------------
class ViTEncoderWithAdaptersPallas:
    def __init__(
        self,
        patch_embed_dim=32,
        stages=(1, 1, 1, 1),
        backbone_channel_list=(256, 128, 64, 32),
        strides=(1, 2, 4, 8),
        adapter_hidden_dim=16,
        blocks_with_adapters=(-2, -1),
        seed=0,
        dtype=jnp.float32,
        tile_n=512,
    ):
        self.patch_embed_dim = patch_embed_dim
        self.adapter_hidden_dim = adapter_hidden_dim
        self.tile_n = tile_n

        chans = list(backbone_channel_list)[::-1]  # module reverses the list
        vit_block_dims, block_strides = [], []
        for stage, dim, stride in zip(stages, chans, strides):
            vit_block_dims.extend([dim] * stage)
            block_strides.extend([stride] * stage)
        n_blocks = len(vit_block_dims)
        self.blocks_with_adapters = [
            i if i >= 0 else n_blocks + i for i in blocks_with_adapters
        ]
        self.vit_block_dims = vit_block_dims
        self.block_strides = block_strides

        key = jax.random.PRNGKey(seed)
        k_pw, k_pb, key = jax.random.split(key, 3)
        scale = 0.02
        # patch_adapter: Linear(patch_embed_dim -> adapter_hidden_dim) + ReLU
        self.patch_w = (
            jax.random.normal(k_pw, (patch_embed_dim, adapter_hidden_dim), dtype) * scale
        )
        self.patch_b = jax.random.normal(k_pb, (1, adapter_hidden_dim), dtype) * scale

        # ConvAdapters for selected blocks: conv weight as [s*s*Hid, Cout] matmul,
        # plus the derived block-diagonal "grouped" patch-adapter weight for fusion.
        self.adapter_params = {}
        for i in self.blocks_with_adapters:
            dim, stride = vit_block_dims[i], block_strides[i]
            kw, kb, key = jax.random.split(key, 3)
            s2 = stride * stride
            wc = jax.random.normal(kw, (s2 * adapter_hidden_dim, dim), dtype) * scale
            bc = jax.random.normal(kb, (1, dim), dtype) * scale
            g = _pick_group(s2, patch_embed_dim)
            wp_g = jnp.kron(jnp.eye(g, dtype=dtype), self.patch_w)   # (g*Cin, g*Hid)
            bp_g = jnp.tile(self.patch_b, (1, g))                    # (1, g*Hid)
            self.adapter_params[i] = dict(
                wc=wc, bc=bc, stride=stride, group=g, wp_g=wp_g, bp_g=bp_g
            )

    def __call__(self, patch_embed_out, block_outputs):
        """patch_embed_out: [B,H,W,patch_embed_dim] (NHWC, as Hiera patch_embed emits)
        block_outputs: dict {block_idx: [B,H/s,W/s,dim]} for blocks with adapters.
        Returns dict of adapted block outputs (prompt + output), mirroring the hooks."""
        adapted = {}
        for i, out in block_outputs.items():
            ap = self.adapter_params[i]
            adapted[i] = fused_conv_adapter_add(
                patch_embed_out, out,
                ap["wp_g"], ap["bp_g"], ap["wc"], ap["bc"],
                ap["stride"], ap["group"], tile_n=self.tile_n,
            )
        return adapted


# ---------------------------------------------------------------------------
# Pure-JAX reference for correctness checking.
# ---------------------------------------------------------------------------
def _reference(model, patch_embed_out, block_outputs):
    B, H, W, Cin = patch_embed_out.shape
    pe = jnp.maximum(
        patch_embed_out.reshape(-1, Cin) @ model.patch_w + model.patch_b, 0.0
    ).reshape(B, H, W, -1)
    ref = {}
    for i, out in block_outputs.items():
        ap = model.adapter_params[i]
        s = ap["stride"]
        Ho, Wo, Cout = out.shape[1:]
        p = pe.reshape(B, Ho, s, Wo, s, -1).transpose(0, 1, 3, 2, 4, 5)
        p = p.reshape(B * Ho * Wo, -1)
        prompt = (p @ ap["wc"] + ap["bc"]).reshape(B, Ho, Wo, Cout)
        ref[i] = prompt + out
    return ref


if __name__ == "__main__":
    B, H, W = 2, 16, 16
    model = ViTEncoderWithAdaptersPallas(
        patch_embed_dim=32,
        stages=(1, 1, 1, 1),
        backbone_channel_list=(256, 128, 64, 32),
        strides=(1, 2, 4, 8),
        adapter_hidden_dim=16,
        blocks_with_adapters=(-2, -1),
        seed=0,
    )

    key = jax.random.PRNGKey(0)
    k0, k1, k2 = jax.random.split(key, 3)
    # Synthetic backbone activations (stand-in for the external Hiera trunk):
    patch_embed_out = jax.random.normal(k0, (B, H, W, 32), jnp.float32)
    block_outputs = {}
    for kk, i in zip((k1, k2), model.blocks_with_adapters):
        dim, s = model.vit_block_dims[i], model.block_strides[i]
        block_outputs[i] = jax.random.normal(kk, (B, H // s, W // s, dim), jnp.float32)

    adapted = model(patch_embed_out, block_outputs)
    adapted = jax.tree_util.tree_map(jax.block_until_ready, adapted)

    ref = _reference(model, patch_embed_out, block_outputs)
    for i in adapted:
        np.testing.assert_allclose(
            np.asarray(adapted[i]), np.asarray(ref[i]), rtol=1e-5, atol=2e-5
        )
    print("KERNEL_OK")
</pallas_src>

<mosaic_0001>
module attributes {stable_mosaic.version = 11 : i64} {
  func.func @_fused_adapter_kernel(%arg0: i32, %arg1: memref<32x512xf32, #tpu.memory_space<vmem>>, %arg2: memref<128x64xf32, #tpu.memory_space<vmem>>, %arg3: memref<1x64xf32, #tpu.memory_space<vmem>>, %arg4: memref<256x128xf32, #tpu.memory_space<vmem>>, %arg5: memref<1x128xf32, #tpu.memory_space<vmem>>, %arg6: memref<32x128xf32, #tpu.memory_space<vmem>>, %arg7: memref<32x128xf32, #tpu.memory_space<vmem>>) attributes {dimension_semantics = [#tpu.dimension_semantics<parallel>], iteration_bounds = array<i64: 1>, scalar_prefetch = 0 : i64, scratch_operands = 0 : i64, tpu.core_type = #tpu.core_type<tc>, window_params = [{transform_indices = @transform_0, window_bounds = array<i64: 32, 512>}, {pipeline_mode = #tpu.pipeline_mode<synchronous>, transform_indices = @transform_1, window_bounds = array<i64: 128, 64>}, {pipeline_mode = #tpu.pipeline_mode<synchronous>, transform_indices = @transform_2, window_bounds = array<i64: 1, 64>}, {pipeline_mode = #tpu.pipeline_mode<synchronous>, transform_indices = @transform_3, window_bounds = array<i64: 256, 128>}, {pipeline_mode = #tpu.pipeline_mode<synchronous>, transform_indices = @transform_4, window_bounds = array<i64: 1, 128>}, {transform_indices = @transform_5, window_bounds = array<i64: 32, 128>}, {transform_indices = @transform_6, window_bounds = array<i64: 32, 128>}]} {
    %c0 = arith.constant 0 : index
    %c0_0 = arith.constant 0 : index
    %0 = vector.load %arg6[%c0, %c0_0] : memref<32x128xf32, #tpu.memory_space<vmem>>, vector<32x128xf32>
    %c0_1 = arith.constant 0 : index
    %c0_2 = arith.constant 0 : index
    %1 = vector.load %arg5[%c0_1, %c0_2] : memref<1x128xf32, #tpu.memory_space<vmem>>, vector<1x128xf32>
    %2 = vector.broadcast %1 : vector<1x128xf32> to vector<32x128xf32>
    %3 = arith.addf %0, %2 : vector<32x128xf32>
    %c0_3 = arith.constant 0 : index
    %c0_4 = arith.constant 0 : index
    %4 = vector.load %arg2[%c0_3, %c0_4] : memref<128x64xf32, #tpu.memory_space<vmem>>, vector<128x64xf32>
    %c0_5 = arith.constant 0 : index
    %c0_6 = arith.constant 0 : index
    %5 = vector.load %arg3[%c0_5, %c0_6] : memref<1x64xf32, #tpu.memory_space<vmem>>, vector<1x64xf32>
    %c0_7 = arith.constant 0 : index
    %c0_8 = arith.constant 0 : index
    %6 = vector.load %arg1[%c0_7, %c0_8] : memref<32x512xf32, #tpu.memory_space<vmem>>, vector<32x128xf32>
    %cst = arith.constant dense<0.000000e+00> : vector<32x64xf32>
    %7 = tpu.matmul %6, %4, %cst {dimension_numbers = #tpu.dot_dimension_numbers<[1], [0], [0], [1], [0, 0, 1, 1], [], []>} : vector<32x128xf32>, vector<128x64xf32>, vector<32x64xf32> -> vector<32x64xf32>
    %8 = vector.broadcast %5 : vector<1x64xf32> to vector<32x64xf32>
    %9 = arith.addf %7, %8 : vector<32x64xf32>
    %cst_9 = arith.constant 0.000000e+00 : f32
    %10 = vector.broadcast %cst_9 : f32 to vector<32x64xf32>
    %11 = arith.maximumf %9, %10 : vector<32x64xf32>
    %c0_10 = arith.constant 0 : index
    %c0_11 = arith.constant 0 : index
    %12 = vector.load %arg4[%c0_10, %c0_11] : memref<256x128xf32, #tpu.memory_space<vmem>>, vector<64x128xf32>
    %cst_12 = arith.constant dense<0.000000e+00> : vector<32x128xf32>
    %13 = tpu.matmul %11, %12, %cst_12 {dimension_numbers = #tpu.dot_dimension_numbers<[1], [0], [0], [1], [0, 0, 1, 1], [], []>} : vector<32x64xf32>, vector<64x128xf32>, vector<32x128xf32> -> vector<32x128xf32>
    %14 = arith.addf %3, %13 : vector<32x128xf32>
    %c0_13 = arith.constant 0 : index
    %c128 = arith.constant 128 : index
    %15 = vector.load %arg1[%c0_13, %c128] : memref<32x512xf32, #tpu.memory_space<vmem>>, vector<32x128xf32>
    %cst_14 = arith.constant dense<0.000000e+00> : vector<32x64xf32>
    %16 = tpu.matmul %15, %4, %cst_14 {dimension_numbers = #tpu.dot_dimension_numbers<[1], [0], [0], [1], [0, 0, 1, 1], [], []>} : vector<32x128xf32>, vector<128x64xf32>, vector<32x64xf32> -> vector<32x64xf32>
    %17 = vector.broadcast %5 : vector<1x64xf32> to vector<32x64xf32>
    %18 = arith.addf %16, %17 : vector<32x64xf32>
    %cst_15 = arith.constant 0.000000e+00 : f32
    %19 = vector.broadcast %cst_15 : f32 to vector<32x64xf32>
    %20 = arith.maximumf %18, %19 : vector<32x64xf32>
    %c64 = arith.constant 64 : index
    %c0_16 = arith.constant 0 : index
    %21 = vector.load %arg4[%c64, %c0_16] : memref<256x128xf32, #tpu.memory_space<vmem>>, vector<64x128xf32>
    %cst_17 = arith.constant dense<0.000000e+00> : vector<32x128xf32>
    %22 = tpu.matmul %20, %21, %cst_17 {dimension_numbers = #tpu.dot_dimension_numbers<[1], [0], [0], [1], [0, 0, 1, 1], [], []>} : vector<32x64xf32>, vector<64x128xf32>, vector<32x128xf32> -> vector<32x128xf32>
    %23 = arith.addf %14, %22 : vector<32x128xf32>
    %c0_18 = arith.constant 0 : index
    %c256 = arith.constant 256 : index
    %24 = vector.load %arg1[%c0_18, %c256] : memref<32x512xf32, #tpu.memory_space<vmem>>, vector<32x128xf32>
    %cst_19 = arith.constant dense<0.000000e+00> : vector<32x64xf32>
    %25 = tpu.matmul %24, %4, %cst_19 {dimension_numbers = #tpu.dot_dimension_numbers<[1], [0], [0], [1], [0, 0, 1, 1], [], []>} : vector<32x128xf32>, vector<128x64xf32>, vector<32x64xf32> -> vector<32x64xf32>
    %26 = vector.broadcast %5 : vector<1x64xf32> to vector<32x64xf32>
    %27 = arith.addf %25, %26 : vector<32x64xf32>
    %cst_20 = arith.constant 0.000000e+00 : f32
    %28 = vector.broadcast %cst_20 : f32 to vector<32x64xf32>
    %29 = arith.maximumf %27, %28 : vector<32x64xf32>
    %c128_21 = arith.constant 128 : index
    %c0_22 = arith.constant 0 : index
    %30 = vector.load %arg4[%c128_21, %c0_22] : memref<256x128xf32, #tpu.memory_space<vmem>>, vector<64x128xf32>
    %cst_23 = arith.constant dense<0.000000e+00> : vector<32x128xf32>
    %31 = tpu.matmul %29, %30, %cst_23 {dimension_numbers = #tpu.dot_dimension_numbers<[1], [0], [0], [1], [0, 0, 1, 1], [], []>} : vector<32x64xf32>, vector<64x128xf32>, vector<32x128xf32> -> vector<32x128xf32>
    %32 = arith.addf %23, %31 : vector<32x128xf32>
    %c0_24 = arith.constant 0 : index
    %c384 = arith.constant 384 : index
    %33 = vector.load %arg1[%c0_24, %c384] : memref<32x512xf32, #tpu.memory_space<vmem>>, vector<32x128xf32>
    %cst_25 = arith.constant dense<0.000000e+00> : vector<32x64xf32>
    %34 = tpu.matmul %33, %4, %cst_25 {dimension_numbers = #tpu.dot_dimension_numbers<[1], [0], [0], [1], [0, 0, 1, 1], [], []>} : vector<32x128xf32>, vector<128x64xf32>, vector<32x64xf32> -> vector<32x64xf32>
    %35 = vector.broadcast %5 : vector<1x64xf32> to vector<32x64xf32>
    %36 = arith.addf %34, %35 : vector<32x64xf32>
    %cst_26 = arith.constant 0.000000e+00 : f32
    %37 = vector.broadcast %cst_26 : f32 to vector<32x64xf32>
    %38 = arith.maximumf %36, %37 : vector<32x64xf32>
    %c192 = arith.constant 192 : index
    %c0_27 = arith.constant 0 : index
    %39 = vector.load %arg4[%c192, %c0_27] : memref<256x128xf32, #tpu.memory_space<vmem>>, vector<64x128xf32>
    %cst_28 = arith.constant dense<0.000000e+00> : vector<32x128xf32>
    %40 = tpu.matmul %38, %39, %cst_28 {dimension_numbers = #tpu.dot_dimension_numbers<[1], [0], [0], [1], [0, 0, 1, 1], [], []>} : vector<32x64xf32>, vector<64x128xf32>, vector<32x128xf32> -> vector<32x128xf32>
    %41 = arith.addf %32, %40 : vector<32x128xf32>
    %c0_29 = arith.constant 0 : index
    %c0_30 = arith.constant 0 : index
    %42 = vector.load %arg7[%c0_29, %c0_30] : memref<32x128xf32, #tpu.memory_space<vmem>>, vector<32x128xf32>
    tpu.vector_store %arg7[%c0_29, %c0_30], %41 {strides = array<i32>} : memref<32x128xf32, #tpu.memory_space<vmem>>, vector<32x128xf32>,
    return
  }
  func.func @transform_0(%arg0: i32) -> (i32, i32) {
    %c0_i32 = arith.constant 0 : i32
    %c0_i32_0 = arith.constant 0 : i32
    return %arg0, %c0_i32 : i32, i32
  }
  func.func @transform_1(%arg0: i32) -> (i32, i32) {
    %c0_i32 = arith.constant 0 : i32
    %c0_i32_0 = arith.constant 0 : i32
    %c0_i32_1 = arith.constant 0 : i32
    return %c0_i32, %c0_i32_0 : i32, i32
  }
  func.func @transform_2(%arg0: i32) -> (i32, i32) {
    %c0_i32 = arith.constant 0 : i32
    %c0_i32_0 = arith.constant 0 : i32
    %c0_i32_1 = arith.constant 0 : i32
    return %c0_i32, %c0_i32_0 : i32, i32
  }
  func.func @transform_3(%arg0: i32) -> (i32, i32) {
    %c0_i32 = arith.constant 0 : i32
    %c0_i32_0 = arith.constant 0 : i32
    %c0_i32_1 = arith.constant 0 : i32
    return %c0_i32, %c0_i32_0 : i32, i32
  }
  func.func @transform_4(%arg0: i32) -> (i32, i32) {
    %c0_i32 = arith.constant 0 : i32
    %c0_i32_0 = arith.constant 0 : i32
    %c0_i32_1 = arith.constant 0 : i32
    return %c0_i32, %c0_i32_0 : i32, i32
  }
  func.func @transform_5(%arg0: i32) -> (i32, i32) {
    %c0_i32 = arith.constant 0 : i32
    %c0_i32_0 = arith.constant 0 : i32
    return %arg0, %c0_i32 : i32, i32
  }
  func.func @transform_6(%arg0: i32) -> (i32, i32) {
    %c0_i32 = arith.constant 0 : i32
    %c0_i32_0 = arith.constant 0 : i32
    return %arg0, %c0_i32 : i32, i32
  }
}

</mosaic_0001>

<llo_original>
// kernel: fused_conv_adapter_add.1
$region0: #{fused_conv_adapter_add.1}
  #allocation0 [shape = 'u32[]', space=smem, size = 0x4, offset = 0x4, fixed_abs, tag = 'smem constant byte address 0x4 - core index']
  #allocation1 [shape = 'u32[72,128]{1,0:T(1,128)}', space=vmem, size = 0x9000, scoped, tag = 'internal scratch']
  %s0 = inlined_call_operand.vmem [shape: f32[32,512], index: 0, kind: input, shape index: {}]
  %s1 = inlined_call_operand.vmem [shape: f32[128,64], index: 1, kind: input, shape index: {}]
  %s2 = inlined_call_operand.vmem [shape: f32[1,64], index: 2, kind: input, shape index: {}]
  %s3 = inlined_call_operand.vmem [shape: f32[256,128], index: 3, kind: input, shape index: {}]
  %s4 = inlined_call_operand.vmem [shape: f32[1,128], index: 4, kind: input, shape index: {}]
  %s5 = inlined_call_operand.vmem [shape: f32[32,128], index: 5, kind: input, shape index: {}, may-alias: {5,6}]
  %s6 = inlined_call_operand.vmem [shape: f32[32,128], index: 6, kind: output, shape index: {}, may-alias: {5,6}]
  %s7 = sld [smem:[#allocation0]]
  $region34: #{fused_conv_adapter_add.1} parent=0
    _
  %s9 = ssub.s32 1, %s7
  %s10 = scalar_select 0, %s9, %s7
  // Predicated region
  $region2: #{fused_conv_adapter_add.1} parent=0 // pred_check
    _
  $region3: #{fused_conv_adapter_add.1} parent=0 // pred_check_branch
    %12 = sbr.rel (0) target = $region5
  $region4: #{fused_conv_adapter_add.1} parent=0 // pred_region
    _
  $region5: #{fused_conv_adapter_add.1} parent=0 // pred_fallthru
    _
  // Predicated region
  $region6: #{fused_conv_adapter_add.1} parent=0 // pred_check
    _
  $region7: #{fused_conv_adapter_add.1} parent=0 // pred_check_branch
    %14 = sbr.rel (0) target = $region9
  $region8: #{fused_conv_adapter_add.1} parent=0 // pred_region
    _
  $region9: #{fused_conv_adapter_add.1} parent=0 // pred_fallthru
    _
  // Predicated region
  $region10: #{fused_conv_adapter_add.1} parent=0 // pred_check
    _
  $region11: #{fused_conv_adapter_add.1} parent=0 // pred_check_branch
    %16 = sbr.rel (0) target = $region13
  $region12: #{fused_conv_adapter_add.1} parent=0 // pred_region
    _
  $region13: #{fused_conv_adapter_add.1} parent=0 // pred_fallthru
    _
  // Predicated region
  $region14: #{fused_conv_adapter_add.1} parent=0 // pred_check
    _
  $region15: #{fused_conv_adapter_add.1} parent=0 // pred_check_branch
    %18 = sbr.rel (0) target = $region17
  $region16: #{fused_conv_adapter_add.1} parent=0 // pred_region
    _
  $region17: #{fused_conv_adapter_add.1} parent=0 // pred_fallthru
    _
  // Predicated region
  $region18: #{fused_conv_adapter_add.1} parent=0 // pred_check
    _
  $region19: #{fused_conv_adapter_add.1} parent=0 // pred_check_branch
    %20 = sbr.rel (0) target = $region21
  $region20: #{fused_conv_adapter_add.1} parent=0 // pred_region
    _
  $region21: #{fused_conv_adapter_add.1} parent=0 // pred_fallthru
    _
  // Predicated region
  $region22: #{fused_conv_adapter_add.1} parent=0 // pred_check
    _
  $region23: #{fused_conv_adapter_add.1} parent=0 // pred_check_branch
    %22 = sbr.rel (0) target = $region25
  $region24: #{fused_conv_adapter_add.1} parent=0 // pred_region
    _
  $region25: #{fused_conv_adapter_add.1} parent=0 // pred_fallthru
    _
  %v23 = vld [vmem:[%s5] sm:$0xff]
  %v24 = vld [vmem:[%s5 + $0x8] sm:$0xff]
  %v25 = vld [vmem:[%s5 + $0x10] sm:$0xff]
  %v26 = vld [vmem:[%s5 + $0x18] sm:$0xff]
  %v27 = vld [vmem:[%s4] sm:$0x1]
  %v29 = vperm.slane %v27, 0
  %v31 = vadd.f32 %v23, %v29
  %v32 = vadd.f32 %v24, %v29
  %v33 = vadd.f32 %v25, %v29
  %v34 = vadd.f32 %v26, %v29
  %v35 = vld [vmem:[%s1] sm:$0xff]
  %v36 = vld [vmem:[%s1 + $0x8] sm:$0xff]
  %v37 = vld [vmem:[%s1 + $0x10] sm:$0xff]
  %v38 = vld [vmem:[%s1 + $0x18] sm:$0xff]
  %v39 = vld [vmem:[%s1 + $0x20] sm:$0xff]
  %v40 = vld [vmem:[%s1 + $0x28] sm:$0xff]
  %v41 = vld [vmem:[%s1 + $0x30] sm:$0xff]
  %v42 = vld [vmem:[%s1 + $0x38] sm:$0xff]
  %v43 = vld [vmem:[%s1 + $0x40] sm:$0xff]
  %v44 = vld [vmem:[%s1 + $0x48] sm:$0xff]
  %v45 = vld [vmem:[%s1 + $0x50] sm:$0xff]
  %v46 = vld [vmem:[%s1 + $0x58] sm:$0xff]
  %v47 = vld [vmem:[%s1 + $0x60] sm:$0xff]
  %v48 = vld [vmem:[%s1 + $0x68] sm:$0xff]
  %v49 = vld [vmem:[%s1 + $0x70] sm:$0xff]
  %v50 = vld [vmem:[%s1 + $0x78] sm:$0xff]
  %v51 = vld [vmem:[%s2] sm:$0x1]
  %v52 = vld [vmem:[%s0] sm:$0xff]
  %v53 = vld [vmem:[%s0 + $0x20] sm:$0xff]
  %v54 = vld [vmem:[%s0 + $0x40] sm:$0xff]
  %v55 = vld [vmem:[%s0 + $0x60] sm:$0xff]
  %v57 = vperm.slane %v51, 0
  %59 = vmatpush.msra.mxu0 %v50
  %60 = vmatpush.msra.mxu0 %v49
  %61 = vmatpush.msra.mxu0 %v48
  %62 = vmatpush.msra.mxu0 %v47
  %63 = vmatpush.msra.mxu0 %v46
  %64 = vmatpush.msra.mxu0 %v45
  %65 = vmatpush.msra.mxu0 %v44
  %66 = vmatpush.msra.mxu0 %v43
  %67 = vmatpush.msra.mxu0 %v42
  %68 = vmatpush.msra.mxu0 %v41
  %69 = vmatpush.msra.mxu0 %v40
  %70 = vmatpush.msra.mxu0 %v39
  %71 = vmatpush.msra.mxu0 %v38
  %72 = vmatpush.msra.mxu0 %v37
  %73 = vmatpush.msra.mxu0 %v36
  %74 = vmatpush.msra.mxu0 %v35
  %75 = vmatmul.f32.gmra.mxu0 %v52
  %v76 = vpop.f32.mrf.mxu0
  %v77 = vadd.f32 %v57, %v76
  %78 = vmatmul.f32.gmra.mxu0 %v53
  %v79 = vpop.f32.mrf.mxu0
  %v80 = vadd.f32 %v57, %v79
  %81 = vmatmul.f32.gmra.mxu0 %v54
  %v82 = vpop.f32.mrf.mxu0
  %v83 = vadd.f32 %v57, %v82
  %84 = vmatmul.f32.gmra.mxu0 %v55
  %v85 = vpop.f32.mrf.mxu0
  %v86 = vadd.f32 %v57, %v85
  %87 = vdwg.mxu0
  %v88 = vmax.f32 %v77, 0.0
  %v89 = vmax.f32 %v80, 0.0
  %v90 = vmax.f32 %v83, 0.0
  %v91 = vmax.f32 %v86, 0.0
  %v92 = vld [vmem:[%s3] sm:$0xff]
  %v93 = vld [vmem:[%s3 + $0x8] sm:$0xff]
  %v94 = vld [vmem:[%s3 + $0x10] sm:$0xff]
  %v95 = vld [vmem:[%s3 + $0x18] sm:$0xff]
  %v96 = vld [vmem:[%s3 + $0x20] sm:$0xff]
  %v97 = vld [vmem:[%s3 + $0x28] sm:$0xff]
  %v98 = vld [vmem:[%s3 + $0x30] sm:$0xff]
  %v99 = vld [vmem:[%s3 + $0x38] sm:$0xff]
  %vm100 = vcmask 523264
  %v102 = vsel %vm100, %v88, 0
  %v105 = vsel %vm100, %v89, 0
  %v108 = vsel %vm100, %v90, 0
  %v111 = vsel %vm100, %v91, 0
  %113 = vmatpush.msra.mxu0 0.0
  %114 = vmatpush.msra.mxu0 0.0
  %115 = vmatpush.msra.mxu0 0.0
  %116 = vmatpush.msra.mxu0 0.0
  %117 = vmatpush.msra.mxu0 0.0
  %118 = vmatpush.msra.mxu0 0.0
  %119 = vmatpush.msra.mxu0 0.0
  %120 = vmatpush.msra.mxu0 0.0
  %121 = vmatpush.msra.mxu0 %v99
  %122 = vmatpush.msra.mxu0 %v98
  %123 = vmatpush.msra.mxu0 %v97
  %124 = vmatpush.msra.mxu0 %v96
  %125 = vmatpush.msra.mxu0 %v95
  %126 = vmatpush.msra.mxu0 %v94
  %127 = vmatpush.msra.mxu0 %v93
  %128 = vmatpush.msra.mxu0 %v92
  %129 = vmatmul.f32.gmra.mxu0 %v102
  %v130 = vpop.f32.mrf.mxu0
  %v131 = vadd.f32 0.0, %v130
  %132 = vmatmul.f32.gmra.mxu0 %v105
  %v133 = vpop.f32.mrf.mxu0
  %v134 = vadd.f32 0.0, %v133
  %135 = vmatmul.f32.gmra.mxu0 %v108
  %v136 = vpop.f32.mrf.mxu0
  %v137 = vadd.f32 0.0, %v136
  %138 = vmatmul.f32.gmra.mxu0 %v111
  %v139 = vpop.f32.mrf.mxu0
  %v140 = vadd.f32 0.0, %v139
  %141 = vdwg.mxu0
  %v142 = vadd.f32 %v31, %v131
  %v143 = vadd.f32 %v32, %v134
  %v144 = vadd.f32 %v33, %v137
  %v145 = vadd.f32 %v34, %v140
  %v146 = vld [vmem:[%s0 + $0x8] sm:$0xff]
  %v147 = vld [vmem:[%s0 + $0x28] sm:$0xff]
  %v148 = vld [vmem:[%s0 + $0x48] sm:$0xff]
  %v149 = vld [vmem:[%s0 + $0x68] sm:$0xff]
  %150 = vmatpush.msra.mxu0 %v50
  %151 = vmatpush.msra.mxu0 %v49
  %152 = vmatpush.msra.mxu0 %v48
  %153 = vmatpush.msra.mxu0 %v47
  %154 = vmatpush.msra.mxu0 %v46
  %155 = vmatpush.msra.mxu0 %v45
  %156 = vmatpush.msra.mxu0 %v44
  %157 = vmatpush.msra.mxu0 %v43
  %158 = vmatpush.msra.mxu0 %v42
  %159 = vmatpush.msra.mxu0 %v41
  %160 = vmatpush.msra.mxu0 %v40
  %161 = vmatpush.msra.mxu0 %v39
  %162 = vmatpush.msra.mxu0 %v38
  %163 = vmatpush.msra.mxu0 %v37
  %164 = vmatpush.msra.mxu0 %v36
  %165 = vmatpush.msra.mxu0 %v35
  %166 = vmatmul.f32.gmra.mxu0 %v146
  %v167 = vpop.f32.mrf.mxu0
  %v168 = vadd.f32 %v57, %v167
  %169 = vmatmul.f32.gmra.mxu0 %v147
  %v170 = vpop.f32.mrf.mxu0
  %v171 = vadd.f32 %v57, %v170
  %172 = vmatmul.f32.gmra.mxu0 %v148
  %v173 = vpop.f32.mrf.mxu0
  %v174 = vadd.f32 %v57, %v173
  %175 = vmatmul.f32.gmra.mxu0 %v149
  %v176 = vpop.f32.mrf.mxu0
  %v177 = vadd.f32 %v57, %v176
  %178 = vdwg.mxu0
  %v179 = vmax.f32 %v168, 0.0
  %v180 = vmax.f32 %v171, 0.0
  %v181 = vmax.f32 %v174, 0.0
  %v182 = vmax.f32 %v177, 0.0
  %v183 = vld [vmem:[%s3 + $0x40] sm:$0xff]
  %v184 = vld [vmem:[%s3 + $0x48] sm:$0xff]
  %v185 = vld [vmem:[%s3 + $0x50] sm:$0xff]
  %v186 = vld [vmem:[%s3 + $0x58] sm:$0xff]
  %v187 = vld [vmem:[%s3 + $0x60] sm:$0xff]
  %v188 = vld [vmem:[%s3 + $0x68] sm:$0xff]
  %v189 = vld [vmem:[%s3 + $0x70] sm:$0xff]
  %v190 = vld [vmem:[%s3 + $0x78] sm:$0xff]
  %v192 = vsel %vm100, %v179, 0
  %v195 = vsel %vm100, %v180, 0
  %v198 = vsel %vm100, %v181, 0
  %v201 = vsel %vm100, %v182, 0
  %203 = vmatpush.msra.mxu0 0.0
  %204 = vmatpush.msra.mxu0 0.0
  %205 = vmatpush.msra.mxu0 0.0
  %206 = vmatpush.msra.mxu0 0.0
  %207 = vmatpush.msra.mxu0 0.0
  %208 = vmatpush.msra.mxu0 0.0
  %209 = vmatpush.msra.mxu0 0.0
  %210 = vmatpush.msra.mxu0 0.0
  %211 = vmatpush.msra.mxu0 %v190
  %212 = vmatpush.msra.mxu0 %v189
  %213 = vmatpush.msra.mxu0 %v188
  %214 = vmatpush.msra.mxu0 %v187
  %215 = vmatpush.msra.mxu0 %v186
  %216 = vmatpush.msra.mxu0 %v185
  %217 = vmatpush.msra.mxu0 %v184
  %218 = vmatpush.msra.mxu0 %v183
  %219 = vmatmul.f32.gmra.mxu0 %v192
  %v220 = vpop.f32.mrf.mxu0
  %v221 = vadd.f32 0.0, %v220
  %222 = vmatmul.f32.gmra.mxu0 %v195
  %v223 = vpop.f32.mrf.mxu0
  %v224 = vadd.f32 0.0, %v223
  %225 = vmatmul.f32.gmra.mxu0 %v198
  %v226 = vpop.f32.mrf.mxu0
  %v227 = vadd.f32 0.0, %v226
  %228 = vmatmul.f32.gmra.mxu0 %v201
  %v229 = vpop.f32.mrf.mxu0
  %v230 = vadd.f32 0.0, %v229
  %231 = vdwg.mxu0
  %v232 = vadd.f32 %v142, %v221
  %v233 = vadd.f32 %v143, %v224
  %v234 = vadd.f32 %v144, %v227
  %v235 = vadd.f32 %v145, %v230
  %v236 = vld [vmem:[%s0 + $0x10] sm:$0xff]
  %v237 = vld [vmem:[%s0 + $0x30] sm:$0xff]
  %v238 = vld [vmem:[%s0 + $0x50] sm:$0xff]
  %v239 = vld [vmem:[%s0 + $0x70] sm:$0xff]
  %240 = vmatpush.msra.mxu0 %v50
  %241 = vmatpush.msra.mxu0 %v49
  %242 = vmatpush.msra.mxu0 %v48
  %243 = vmatpush.msra.mxu0 %v47
  %244 = vmatpush.msra.mxu0 %v46
  %245 = vmatpush.msra.mxu0 %v45
  %246 = vmatpush.msra.mxu0 %v44
  %247 = vmatpush.msra.mxu0 %v43
  %248 = vmatpush.msra.mxu0 %v42
  %249 = vmatpush.msra.mxu0 %v41
  %250 = vmatpush.msra.mxu0 %v40
  %251 = vmatpush.msra.mxu0 %v39
  %252 = vmatpush.msra.mxu0 %v38
  %253 = vmatpush.msra.mxu0 %v37
  %254 = vmatpush.msra.mxu0 %v36
  %255 = vmatpush.msra.mxu0 %v35
  %256 = vmatmul.f32.gmra.mxu0 %v236
  %v257 = vpop.f32.mrf.mxu0
  %v258 = vadd.f32 %v57, %v257
  %259 = vmatmul.f32.gmra.mxu0 %v237
  %v260 = vpop.f32.mrf.mxu0
  %v261 = vadd.f32 %v57, %v260
  %262 = vmatmul.f32.gmra.mxu0 %v238
  %v263 = vpop.f32.mrf.mxu0
  %v264 = vadd.f32 %v57, %v263
  %265 = vmatmul.f32.gmra.mxu0 %v239
  %v266 = vpop.f32.mrf.mxu0
  %v267 = vadd.f32 %v57, %v266
  %268 = vdwg.mxu0
  %v269 = vmax.f32 %v258, 0.0
  %v270 = vmax.f32 %v261, 0.0
  %v271 = vmax.f32 %v264, 0.0
  %v272 = vmax.f32 %v267, 0.0
  %v273 = vld [vmem:[%s3 + $0x80] sm:$0xff]
  %v274 = vld [vmem:[%s3 + $0x88] sm:$0xff]
  %v275 = vld [vmem:[%s3 + $0x90] sm:$0xff]
  %v276 = vld [vmem:[%s3 + $0x98] sm:$0xff]
  %v277 = vld [vmem:[%s3 + $0xa0] sm:$0xff]
  %v278 = vld [vmem:[%s3 + $0xa8] sm:$0xff]
  %v279 = vld [vmem:[%s3 + $0xb0] sm:$0xff]
  %v280 = vld [vmem:[%s3 + $0xb8] sm:$0xff]
  %v282 = vsel %vm100, %v269, 0
  %v285 = vsel %vm100, %v270, 0
  %v288 = vsel %vm100, %v271, 0
  %v291 = vsel %vm100, %v272, 0
  %293 = vmatpush.msra.mxu0 0.0
  %294 = vmatpush.msra.mxu0 0.0
  %295 = vmatpush.msra.mxu0 0.0
  %296 = vmatpush.msra.mxu0 0.0
  %297 = vmatpush.msra.mxu0 0.0
  %298 = vmatpush.msra.mxu0 0.0
  %299 = vmatpush.msra.mxu0 0.0
  %300 = vmatpush.msra.mxu0 0.0
  %301 = vmatpush.msra.mxu0 %v280
  %302 = vmatpush.msra.mxu0 %v279
  %303 = vmatpush.msra.mxu0 %v278
  %304 = vmatpush.msra.mxu0 %v277
  %305 = vmatpush.msra.mxu0 %v276
  %306 = vmatpush.msra.mxu0 %v275
  %307 = vmatpush.msra.mxu0 %v274
  %308 = vmatpush.msra.mxu0 %v273
  %309 = vmatmul.f32.gmra.mxu0 %v282
  %v310 = vpop.f32.mrf.mxu0
  %v311 = vadd.f32 0.0, %v310
  %312 = vmatmul.f32.gmra.mxu0 %v285
  %v313 = vpop.f32.mrf.mxu0
  %v314 = vadd.f32 0.0, %v313
  %315 = vmatmul.f32.gmra.mxu0 %v288
  %v316 = vpop.f32.mrf.mxu0
  %v317 = vadd.f32 0.0, %v316
  %318 = vmatmul.f32.gmra.mxu0 %v291
  %v319 = vpop.f32.mrf.mxu0
  %v320 = vadd.f32 0.0, %v319
  %321 = vdwg.mxu0
  %v322 = vadd.f32 %v232, %v311
  %v323 = vadd.f32 %v233, %v314
  %v324 = vadd.f32 %v234, %v317
  %v325 = vadd.f32 %v235, %v320
  %v326 = vld [vmem:[%s0 + $0x18] sm:$0xff]
  %v327 = vld [vmem:[%s0 + $0x38] sm:$0xff]
  %v328 = vld [vmem:[%s0 + $0x58] sm:$0xff]
  %v329 = vld [vmem:[%s0 + $0x78] sm:$0xff]
  %330 = vmatpush.msra.mxu0 %v50
  %331 = vmatpush.msra.mxu0 %v49
  %332 = vmatpush.msra.mxu0 %v48
  %333 = vmatpush.msra.mxu0 %v47
  %334 = vmatpush.msra.mxu0 %v46
  %335 = vmatpush.msra.mxu0 %v45
  %336 = vmatpush.msra.mxu0 %v44
  %337 = vmatpush.msra.mxu0 %v43
  %338 = vmatpush.msra.mxu0 %v42
  %339 = vmatpush.msra.mxu0 %v41
  %340 = vmatpush.msra.mxu0 %v40
  %341 = vmatpush.msra.mxu0 %v39
  %342 = vmatpush.msra.mxu0 %v38
  %343 = vmatpush.msra.mxu0 %v37
  %344 = vmatpush.msra.mxu0 %v36
  %345 = vmatpush.msra.mxu0 %v35
  %346 = vmatmul.f32.gmra.mxu0 %v326
  %v347 = vpop.f32.mrf.mxu0
  %v348 = vadd.f32 %v57, %v347
  %349 = vmatmul.f32.gmra.mxu0 %v327
  %v350 = vpop.f32.mrf.mxu0
  %v351 = vadd.f32 %v57, %v350
  %352 = vmatmul.f32.gmra.mxu0 %v328
  %v353 = vpop.f32.mrf.mxu0
  %v354 = vadd.f32 %v57, %v353
  %355 = vmatmul.f32.gmra.mxu0 %v329
  %v356 = vpop.f32.mrf.mxu0
  %v357 = vadd.f32 %v57, %v356
  %358 = vdwg.mxu0
  %v359 = vmax.f32 %v348, 0.0
  %v360 = vmax.f32 %v351, 0.0
  %v361 = vmax.f32 %v354, 0.0
  %v362 = vmax.f32 %v357, 0.0
  %v363 = vld [vmem:[%s3 + $0xc0] sm:$0xff]
  %v364 = vld [vmem:[%s3 + $0xc8] sm:$0xff]
  %v365 = vld [vmem:[%s3 + $0xd0] sm:$0xff]
  %v366 = vld [vmem:[%s3 + $0xd8] sm:$0xff]
  %v367 = vld [vmem:[%s3 + $0xe0] sm:$0xff]
  %v368 = vld [vmem:[%s3 + $0xe8] sm:$0xff]
  %v369 = vld [vmem:[%s3 + $0xf0] sm:$0xff]
  %v370 = vld [vmem:[%s3 + $0xf8] sm:$0xff]
  %v372 = vsel %vm100, %v359, 0
  %v375 = vsel %vm100, %v360, 0
  %v378 = vsel %vm100, %v361, 0
  %v381 = vsel %vm100, %v362, 0
  %383 = vmatpush.msra.mxu0 0.0
  %384 = vmatpush.msra.mxu0 0.0
  %385 = vmatpush.msra.mxu0 0.0
  %386 = vmatpush.msra.mxu0 0.0
  %387 = vmatpush.msra.mxu0 0.0
  %388 = vmatpush.msra.mxu0 0.0
  %389 = vmatpush.msra.mxu0 0.0
  %390 = vmatpush.msra.mxu0 0.0
  %391 = vmatpush.msra.mxu0 %v370
  %392 = vmatpush.msra.mxu0 %v369
  %393 = vmatpush.msra.mxu0 %v368
  %394 = vmatpush.msra.mxu0 %v367
  %395 = vmatpush.msra.mxu0 %v366
  %396 = vmatpush.msra.mxu0 %v365
  %397 = vmatpush.msra.mxu0 %v364
  %398 = vmatpush.msra.mxu0 %v363
  %399 = vmatmul.f32.gmra.mxu0 %v372
  %v400 = vpop.f32.mrf.mxu0
  %v401 = vadd.f32 0.0, %v400
  %402 = vmatmul.f32.gmra.mxu0 %v375
  %v403 = vpop.f32.mrf.mxu0
  %v404 = vadd.f32 0.0, %v403
  %405 = vmatmul.f32.gmra.mxu0 %v378
  %v406 = vpop.f32.mrf.mxu0
  %v407 = vadd.f32 0.0, %v406
  %408 = vmatmul.f32.gmra.mxu0 %v381
  %v409 = vpop.f32.mrf.mxu0
  %v410 = vadd.f32 0.0, %v409
  %411 = vdwg.mxu0
  %v412 = vadd.f32 %v322, %v401
  %v413 = vadd.f32 %v323, %v404
  %v414 = vadd.f32 %v324, %v407
  %v415 = vadd.f32 %v325, %v410
  %416 = vst [vmem:[%s6] sm:$0xff] %v412
  %417 = vst [vmem:[%s6 + $0x8] sm:$0xff] %v413
  %418 = vst [vmem:[%s6 + $0x10] sm:$0xff] %v414
  %419 = vst [vmem:[%s6 + $0x18] sm:$0xff] %v415
  // Predicated region
  $region26: #{fused_conv_adapter_add.1} parent=0 // pred_check
    _
  $region27: #{fused_conv_adapter_add.1} parent=0 // pred_check_branch
    %421 = sbr.rel (0) target = $region29
  $region28: #{fused_conv_adapter_add.1} parent=0 // pred_region
    _
  $region29: #{fused_conv_adapter_add.1} parent=0 // pred_fallthru
    _
  // Predicated region
  $region30: #{fused_conv_adapter_add.1} parent=0 // pred_check
    _
  $region31: #{fused_conv_adapter_add.1} parent=0 // pred_check_branch
    %423 = sbr.rel (0) target = $region33
  $region32: #{fused_conv_adapter_add.1} parent=0 // pred_region
    _
  $region33: #{fused_conv_adapter_add.1} parent=0 // pred_fallthru
    _

</llo_original>
